<compile_context>
chip_gen: v7x
topology: tpu7x:2x2x1
jax: 0.10.0
libtpu: 0.0.40
codegen_flags: <defaults>
</compile_context>

<pallas_src>
import functools

import jax
import jax.numpy as jnp
from jax.experimental import pallas as pl
from jax.experimental.pallas import tpu as pltpu

_LANES = 128


def _round_up(n, m):
    return (n + m - 1) // m * m


def policy_kernel(x_ref, w1_ref, b1_ref, w2_ref, b2_ref, o_ref):
    # fc1: bf16 MXU matmul with f32 accumulation; f32 bias add + ReLU on VPU.
    h = jnp.dot(x_ref[...], w1_ref[...], preferred_element_type=jnp.float32)
    h = jnp.maximum(h + b1_ref[...], 0.0)
    # fc3: bf16 MXU matmul with f32 accumulation; f32 bias add; bf16 store.
    out = jnp.dot(h.astype(jnp.bfloat16), w2_ref[...],
                  preferred_element_type=jnp.float32)
    o_ref[...] = (out + b2_ref[...]).astype(o_ref.dtype)


def pack_policy_params(w1, b1, w2, b2):
    """Weights pre-transposed (in, out), bf16, hidden/out dims padded to 128.

    Biases stay as f32 (1, padded) row vectors added inside the kernel.
    """
    n_in, hidden = w1.shape
    n_out = w2.shape[1]
    h_p = _round_up(hidden, _LANES)
    nout_p = _round_up(n_out, _LANES)

    w1p = jnp.zeros((n_in, h_p), jnp.float32).at[:, :hidden].set(w1)
    b1p = jnp.zeros((1, h_p), jnp.float32).at[0, :hidden].set(jnp.reshape(b1, (-1,)))
    w2p = jnp.zeros((h_p, nout_p), jnp.float32).at[:hidden, :n_out].set(w2)
    b2p = jnp.zeros((1, nout_p), jnp.float32).at[0, :n_out].set(jnp.reshape(b2, (-1,)))
    return w1p.astype(jnp.bfloat16), b1p, w2p.astype(jnp.bfloat16), b2p


@functools.partial(jax.jit, static_argnames=("n_out", "tile_b"))
def policy_forward(x, w1p, b1p, w2p, b2p, *, n_out, tile_b=2048):
    """relu(x @ w1 + b1) @ w2 + b2.  Whole forward is jitted so the cheap
    cast / pad / slice ops around the pallas_call fuse instead of making
    separate HBM round-trips."""
    b, n_in = x.shape
    assert n_in == w1p.shape[0]
    h_p = w1p.shape[1]
    nout_p = w2p.shape[1]

    x_bf = x.astype(jnp.bfloat16)

    if b <= tile_b:
        # Gridless path: whole batch + all params resident in VMEM, one step.
        out_p = pl.pallas_call(
            policy_kernel,
            out_shape=jax.ShapeDtypeStruct((b, nout_p), jnp.bfloat16),
            in_specs=[pl.BlockSpec(memory_space=pltpu.MemorySpace.VMEM)] * 5,
            out_specs=pl.BlockSpec(memory_space=pltpu.MemorySpace.VMEM),
        )(x_bf, w1p, b1p, w2p, b2p)
    else:
        # Large batch: parallel batch grid; weights/biases stay VMEM-resident
        # (constant index_map), x / out tiles are auto double-buffered.
        b_p = _round_up(b, tile_b)
        if b_p != b:
            x_bf = jnp.pad(x_bf, ((0, b_p - b), (0, 0)))
        out_p = pl.pallas_call(
            policy_kernel,
            out_shape=jax.ShapeDtypeStruct((b_p, nout_p), jnp.bfloat16),
            grid=(b_p // tile_b,),
            in_specs=[
                pl.BlockSpec((tile_b, n_in), lambda i: (i, 0)),   # x (true width)
                pl.BlockSpec((n_in, h_p), lambda i: (0, 0)),      # w1
                pl.BlockSpec((1, h_p), lambda i: (0, 0)),         # b1
                pl.BlockSpec((h_p, nout_p), lambda i: (0, 0)),    # w2
                pl.BlockSpec((1, nout_p), lambda i: (0, 0)),      # b2
            ],
            out_specs=pl.BlockSpec((tile_b, nout_p), lambda i: (i, 0)),
            compiler_params=pltpu.CompilerParams(
                dimension_semantics=("parallel",)),
        )(x_bf, w1p, b1p, w2p, b2p)

    # Slice off lane padding / batch padding; return f32 like the torch module.
    return out_p[:b, :n_out].astype(jnp.float32)


def init_linear_params(key, fan_in, fan_out):
    # Mirrors torch.nn.Linear default init: U(-1/sqrt(fan_in), 1/sqrt(fan_in)).
    # Weight stored already transposed: (fan_in, fan_out).
    kw, kb = jax.random.split(key)
    bound = 1.0 / jnp.sqrt(jnp.float32(fan_in))
    w = jax.random.uniform(kw, (fan_in, fan_out), jnp.float32, -bound, bound)
    b = jax.random.uniform(kb, (fan_out,), jnp.float32, -bound, bound)
    return w, b


if __name__ == "__main__":
    key = jax.random.PRNGKey(0)
    k_x, k_x2, k_x3, k_fc1, k_fc3 = jax.random.split(key, 5)

    B, n_in, hidden, n_out = 8, 32, 80, 16

    x = jax.random.normal(k_x, (B, n_in), jnp.float32)
    w1, b1 = init_linear_params(k_fc1, n_in, hidden)
    w2, b2 = init_linear_params(k_fc3, hidden, n_out)
    w1p, b1p, w2p, b2p = pack_policy_params(w1, b1, w2, b2)

    def ref_fn(xx):
        return jnp.maximum(xx @ w1 + b1, 0.0) @ w2 + b2

    # Small batch: gridless, whole-VMEM, single step.
    out = policy_forward(x, w1p, b1p, w2p, b2p, n_out=n_out)
    jax.block_until_ready(out)
    assert out.shape == (B, n_out)
    assert jnp.allclose(out, ref_fn(x), atol=3e-2, rtol=3e-2), "small-batch mismatch"

    # Medium batch: still a single step (threshold raised per perf review).
    B2 = 512
    x2 = jax.random.normal(k_x2, (B2, n_in), jnp.float32)
    out2 = policy_forward(x2, w1p, b1p, w2p, b2p, n_out=n_out)
    jax.block_until_ready(out2)
    assert out2.shape == (B2, n_out)
    assert jnp.allclose(out2, ref_fn(x2), atol=3e-2, rtol=3e-2), "medium-batch mismatch"

    # Large batch: parallel batch grid with 2 steps (feeds both TCs on v7x).
    B3 = 2048
    x3 = jax.random.normal(k_x3, (B3, n_in), jnp.float32)
    out3 = policy_forward(x3, w1p, b1p, w2p, b2p, n_out=n_out, tile_b=1024)
    jax.block_until_ready(out3)
    assert out3.shape == (B3, n_out)
    assert jnp.allclose(out3, ref_fn(x3), atol=3e-2, rtol=3e-2), "batched mismatch"

    print("KERNEL_OK")
</pallas_src>

<mosaic_0001>
module attributes {stable_mosaic.version = 11 : i64} {
  func.func @policy_kernel(%arg0: memref<8x32xbf16, #tpu.memory_space<vmem>>, %arg1: memref<32x128xbf16, #tpu.memory_space<vmem>>, %arg2: memref<1x128xf32, #tpu.memory_space<vmem>>, %arg3: memref<128x128xbf16, #tpu.memory_space<vmem>>, %arg4: memref<1x128xf32, #tpu.memory_space<vmem>>, %arg5: memref<8x128xbf16, #tpu.memory_space<vmem>>) attributes {dimension_semantics = [], scalar_prefetch = 0 : i64, scratch_operands = 0 : i64, tpu.core_type = #tpu.core_type<tc>} {
    %c0 = arith.constant 0 : index
    %c0_0 = arith.constant 0 : index
    %0 = vector.load %arg0[%c0, %c0_0] : memref<8x32xbf16, #tpu.memory_space<vmem>>, vector<8x32xbf16>
    %c0_1 = arith.constant 0 : index
    %c0_2 = arith.constant 0 : index
    %1 = vector.load %arg1[%c0_1, %c0_2] : memref<32x128xbf16, #tpu.memory_space<vmem>>, vector<32x128xbf16>
    %cst = arith.constant dense<0.000000e+00> : vector<8x128xf32>
    %2 = tpu.matmul %0, %1, %cst {dimension_numbers = #tpu.dot_dimension_numbers<[1], [0], [0], [1], [0, 0, 1, 1], [], []>} : vector<8x32xbf16>, vector<32x128xbf16>, vector<8x128xf32> -> vector<8x128xf32>
    %c0_3 = arith.constant 0 : index
    %c0_4 = arith.constant 0 : index
    %3 = vector.load %arg2[%c0_3, %c0_4] : memref<1x128xf32, #tpu.memory_space<vmem>>, vector<1x128xf32>
    %4 = vector.broadcast %3 : vector<1x128xf32> to vector<8x128xf32>
    %5 = arith.addf %2, %4 : vector<8x128xf32>
    %cst_5 = arith.constant 0.000000e+00 : f32
    %6 = vector.broadcast %cst_5 : f32 to vector<8x128xf32>
    %7 = arith.maximumf %5, %6 : vector<8x128xf32>
    %8 = arith.truncf %7 : vector<8x128xf32> to vector<8x128xbf16>
    %c0_6 = arith.constant 0 : index
    %c0_7 = arith.constant 0 : index
    %9 = vector.load %arg3[%c0_6, %c0_7] : memref<128x128xbf16, #tpu.memory_space<vmem>>, vector<128x128xbf16>
    %cst_8 = arith.constant dense<0.000000e+00> : vector<8x128xf32>
    %10 = tpu.matmul %8, %9, %cst_8 {dimension_numbers = #tpu.dot_dimension_numbers<[1], [0], [0], [1], [0, 0, 1, 1], [], []>} : vector<8x128xbf16>, vector<128x128xbf16>, vector<8x128xf32> -> vector<8x128xf32>
    %c0_9 = arith.constant 0 : index
    %c0_10 = arith.constant 0 : index
    %11 = vector.load %arg4[%c0_9, %c0_10] : memref<1x128xf32, #tpu.memory_space<vmem>>, vector<1x128xf32>
    %12 = vector.broadcast %11 : vector<1x128xf32> to vector<8x128xf32>
    %13 = arith.addf %10, %12 : vector<8x128xf32>
    %14 = arith.truncf %13 : vector<8x128xf32> to vector<8x128xbf16>
    %c0_11 = arith.constant 0 : index
    %c0_12 = arith.constant 0 : index
    %15 = vector.load %arg5[%c0_11, %c0_12] : memref<8x128xbf16, #tpu.memory_space<vmem>>, vector<8x128xbf16>
    tpu.vector_store %arg5[%c0_11, %c0_12], %14 {strides = array<i32>} : memref<8x128xbf16, #tpu.memory_space<vmem>>, vector<8x128xbf16>,
    return
  }
}

</mosaic_0001>

<llo_original>
// kernel: policy_forward.1
$region0: #{policy_forward.1}
  #allocation0 [shape = 'u32[]', space=smem, size = 0x4, offset = 0x4, fixed_abs, tag = 'smem constant byte address 0x4 - core index']
  #allocation1 [shape = 'u32[144,128]{1,0:T(1,128)}', space=vmem, size = 0x12000, scoped, tag = 'internal scratch']
  %s0 = inlined_call_operand.vmem [shape: bf16[8,32], index: 0, kind: input, shape index: {}]
  %s1 = inlined_call_operand.hbm [shape: bf16[32,128], index: 1, kind: input, shape index: {}]
  %s2 = inlined_call_operand.vmem [shape: f32[1,128], index: 2, kind: input, shape index: {}]
  %s3 = inlined_call_operand.hbm [shape: bf16[128,128], index: 3, kind: input, shape index: {}]
  %s4 = inlined_call_operand.vmem [shape: f32[1,128], index: 4, kind: input, shape index: {}]
  %s5 = inlined_call_operand.vmem [shape: bf16[8,128], index: 5, kind: output, shape index: {}]
  %s6 = sld [smem:[#allocation0]]
  $region38: #{policy_forward.1} parent=0
    _
  %s8 = ssub.s32 1, %s6
  %s9 = scalar_select 0, %s8, %s6
  $region1: #{policy_forward.1} parent=0
    #allocation2 [shape = 'u8[8192]{0}', space=vmem, size = 0x2000, scoped, tag = 'input window, operand 1, single buffered']
    #allocation3 [shape = 's32[1]{0}', space=sflag, size = 0x4, scoped, tag = 'scoped memory for policy_forward.1']
    #allocation4 [shape = 'u8[32768]{0}', space=vmem, size = 0x8000, scoped, tag = 'input window, operand 3, single buffered']
    #allocation5 [shape = 's32[1]{0}', space=sflag, size = 0x4, scoped, tag = 'scoped memory for policy_forward.1']
    %10 = vsyncpa [#allocation3], 0
    %11 = vsyncpa [#allocation5], 0
    // Predicated region
    $region2: #{policy_forward.1} parent=1 // pred_check
      _
    $region3: #{policy_forward.1} parent=1 // pred_check_branch
      %13 = sbr.rel (0) target = $region5
    $region4: #{policy_forward.1} parent=1 // pred_region
      _
    $region5: #{policy_forward.1} parent=1 // pred_fallthru
      _
    // Predicated region
    $region6: #{policy_forward.1} parent=1 // pred_check
      _
    $region7: #{policy_forward.1} parent=1 // pred_check_branch
      %15 = sbr.rel (0) target = $region9
    $region8: #{policy_forward.1} parent=1 // pred_region
      %s17 = ssub.s32 256, 256
      %18 = vsyncadd [#allocation3], %s17
      %s19 = sshll.u32 [#allocation2], 4
      %s20 = int_to_ptr.vmem [resolvable:$true] %s19
      %25 = dma.hbm_to_vmem [thread:$0]  %s1, 256, %s20, [#allocation3], 64, 64, 4
    $region9: #{policy_forward.1} parent=1 // pred_fallthru
      _
    // Predicated region
    $region10: #{policy_forward.1} parent=1 // pred_check
      _
    $region11: #{policy_forward.1} parent=1 // pred_check_branch
      %27 = sbr.rel (0) target = $region13
    $region12: #{policy_forward.1} parent=1 // pred_region
      _
    $region13: #{policy_forward.1} parent=1 // pred_fallthru
      _
    // Predicated region
    $region14: #{policy_forward.1} parent=1 // pred_check
      _
    $region15: #{policy_forward.1} parent=1 // pred_check_branch
      %29 = sbr.rel (0) target = $region17
    $region16: #{policy_forward.1} parent=1 // pred_region
      %s31 = ssub.s32 1024, 1024
      %32 = vsyncadd [#allocation5], %s31
      %s33 = sshll.u32 [#allocation4], 4
      %s34 = int_to_ptr.vmem [resolvable:$true] %s33
      %39 = dma.hbm_to_vmem [thread:$0]  %s3, 1024, %s34, [#allocation5], 64, 64, 4
    $region17: #{policy_forward.1} parent=1 // pred_fallthru
      _
    // Predicated region
    $region18: #{policy_forward.1} parent=1 // pred_check
      _
    $region19: #{policy_forward.1} parent=1 // pred_check_branch
      %41 = sbr.rel (0) target = $region21
    $region20: #{policy_forward.1} parent=1 // pred_region
      _
    $region21: #{policy_forward.1} parent=1 // pred_fallthru
      _
    // Predicated region
    $region22: #{policy_forward.1} parent=1 // pred_check
      _
    $region23: #{policy_forward.1} parent=1 // pred_check_branch
      %43 = sbr.rel (0) target = $region25
    $region24: #{policy_forward.1} parent=1 // pred_region
      %44 = dma.done [#allocation3], 256
    $region25: #{policy_forward.1} parent=1 // pred_fallthru
      _
    // Predicated region
    $region26: #{policy_forward.1} parent=1 // pred_check
      _
    $region27: #{policy_forward.1} parent=1 // pred_check_branch
      %46 = sbr.rel (0) target = $region29
    $region28: #{policy_forward.1} parent=1 // pred_region
      %47 = dma.done [#allocation5], 1024
    $region29: #{policy_forward.1} parent=1 // pred_fallthru
      _
    %v49 = vld [vmem:[%s0] sm:$0xf]
    %v50 = vld [vmem:[#allocation2] sm:$0xf]
    %v51 = vld [vmem:[#allocation2 + $0x4] sm:$0xf]
    %v52 = vld [vmem:[#allocation2 + $0x8] sm:$0xf]
    %v53 = vld [vmem:[#allocation2 + $0xc] sm:$0xf]
    %v54 = vld [vmem:[%s2] sm:$0x1]
    %v56 = vlaneseq
    %v57 = vshrl.u32 %v56, 7
    %v58 = vsub.s32 0, %v57
    %v59 = vrot.slane %v54, %v58
    %v65 = vunpack.c.l.b16 %v50
    %v66 = vunpack.c.l.b16 %v51
    %v67 = vunpack.c.l.b16 %v52
    %v68 = vunpack.c.l.b16 %v53
    %v69 = vpack.c.b16 %v66, %v65
    %v70 = vpack.c.b16 %v68, %v67
    %vm73 = vcmask 261120
    %v75 = vsel %vm73, %v49, 0
    %77 = vmatprep.subr.bf16.mxu0 0
    %78 = vmatpush1.bf16.msra.mxu0 %v69
    %79 = vmatprep.subr.bf16.mxu0 0
    %80 = vmatpush1.bf16.msra.mxu0 %v70
    %81 = vmatprep.subr.bf16.mxu0 0
    %82 = vmatpush1.bf16.msra.mxu0 0
    %83 = vmatprep.subr.bf16.mxu0 0
    %84 = vmatpush1.bf16.msra.mxu0 0
    %85 = vmatprep.subr.bf16.mxu0 0
    %86 = vmatpush1.bf16.msra.mxu0 0
    %87 = vmatprep.subr.bf16.mxu0 0
    %88 = vmatpush1.bf16.msra.mxu0 0
    %89 = vmatprep.subr.bf16.mxu0 0
    %90 = vmatpush1.bf16.msra.mxu0 0
    %91 = vmatprep.subr.bf16.mxu0 0
    %92 = vmatpush1.bf16.msra.mxu0 0
    %93 = vmatprep.subr.bf16.mxu0 0
    %94 = vmatpush1.bf16.msra.mxu0 0
    %95 = vmatprep.subr.bf16.mxu0 0
    %96 = vmatpush1.bf16.msra.mxu0 0
    %97 = vmatprep.subr.bf16.mxu0 0
    %98 = vmatpush1.bf16.msra.mxu0 0
    %99 = vmatprep.subr.bf16.mxu0 0
    %100 = vmatpush1.bf16.msra.mxu0 0
    %101 = vmatprep.subr.bf16.mxu0 0
    %102 = vmatpush1.bf16.msra.mxu0 0
    %103 = vmatprep.subr.bf16.mxu0 0
    %104 = vmatpush1.bf16.msra.mxu0 0
    %105 = vmatprep.subr.bf16.mxu0 0
    %106 = vmatpush1.bf16.msra.mxu0 0
    %107 = vmatprep.subr.bf16.mxu0 0
    %108 = vmatpush1.bf16.msra.mxu0 0
    %109 = vmatprep.mubr.bf16.mxu0 0
    %110 = vmatmul.mubr.bf16.gmra.mrb[0].mxu0 %v75
    %v111 = vpop.f32.mrb[0].mxu0
    %v112 = vadd.f32 %v59, %v111
    %v113 = vpop.f32.mrb[0].mxu0
    %v114 = vpop.f32.mrb[0].mxu0
    %v115 = vpop.f32.mrb[0].mxu0
    %116 = vdwg.mxu0
    %v117 = vmax.f32 %v112, 0.0
    %v118 = vpack.c.bf16 %v117, %v117
    %v119 = vld [vmem:[#allocation4] sm:$0xf]
    %v120 = vld [vmem:[#allocation4 + $0x4] sm:$0xf]
    %v121 = vld [vmem:[#allocation4 + $0x8] sm:$0xf]
    %v122 = vld [vmem:[#allocation4 + $0xc] sm:$0xf]
    %v123 = vld [vmem:[#allocation4 + $0x10] sm:$0xf]
    %v124 = vld [vmem:[#allocation4 + $0x14] sm:$0xf]
    %v125 = vld [vmem:[#allocation4 + $0x18] sm:$0xf]
    %v126 = vld [vmem:[#allocation4 + $0x1c] sm:$0xf]
    %v127 = vld [vmem:[#allocation4 + $0x20] sm:$0xf]
    %v128 = vld [vmem:[#allocation4 + $0x24] sm:$0xf]
    %v129 = vld [vmem:[#allocation4 + $0x28] sm:$0xf]
    %v130 = vld [vmem:[#allocation4 + $0x2c] sm:$0xf]
    %v131 = vld [vmem:[#allocation4 + $0x30] sm:$0xf]
    %v132 = vld [vmem:[#allocation4 + $0x34] sm:$0xf]
    %v133 = vld [vmem:[#allocation4 + $0x38] sm:$0xf]
    %v134 = vld [vmem:[#allocation4 + $0x3c] sm:$0xf]
    %v135 = vld [vmem:[%s4] sm:$0x1]
    %v137 = vlaneseq
    %v138 = vshrl.u32 %v137, 7
    %v139 = vsub.s32 0, %v138
    %v140 = vrot.slane %v135, %v139
    %v158 = vunpack.c.l.b16 %v119
    %v159 = vunpack.c.l.b16 %v120
    %v160 = vunpack.c.l.b16 %v121
    %v161 = vunpack.c.l.b16 %v122
    %v162 = vunpack.c.l.b16 %v123
    %v163 = vunpack.c.l.b16 %v124
    %v164 = vunpack.c.l.b16 %v125
    %v165 = vunpack.c.l.b16 %v126
    %v166 = vunpack.c.l.b16 %v127
    %v167 = vunpack.c.l.b16 %v128
    %v168 = vunpack.c.l.b16 %v129
    %v169 = vunpack.c.l.b16 %v130
    %v170 = vunpack.c.l.b16 %v131
    %v171 = vunpack.c.l.b16 %v132
    %v172 = vunpack.c.l.b16 %v133
    %v173 = vunpack.c.l.b16 %v134
    %v174 = vpack.c.b16 %v159, %v158
    %v175 = vpack.c.b16 %v161, %v160
    %v176 = vpack.c.b16 %v163, %v162
    %v177 = vpack.c.b16 %v165, %v164
    %v178 = vpack.c.b16 %v167, %v166
    %v179 = vpack.c.b16 %v169, %v168
    %v180 = vpack.c.b16 %v171, %v170
    %v181 = vpack.c.b16 %v173, %v172
    %190 = vmatprep.subr.bf16.mxu0 0
    %191 = vmatpush1.bf16.msra.mxu0 %v174
    %192 = vmatprep.subr.bf16.mxu0 0
    %193 = vmatpush1.bf16.msra.mxu0 %v175
    %194 = vmatprep.subr.bf16.mxu0 0
    %195 = vmatpush1.bf16.msra.mxu0 %v176
    %196 = vmatprep.subr.bf16.mxu0 0
    %197 = vmatpush1.bf16.msra.mxu0 %v177
    %198 = vmatprep.subr.bf16.mxu0 0
    %199 = vmatpush1.bf16.msra.mxu0 %v178
    %200 = vmatprep.subr.bf16.mxu0 0
    %201 = vmatpush1.bf16.msra.mxu0 %v179
    %202 = vmatprep.subr.bf16.mxu0 0
    %203 = vmatpush1.bf16.msra.mxu0 %v180
    %204 = vmatprep.subr.bf16.mxu0 0
    %205 = vmatpush1.bf16.msra.mxu0 %v181
    %206 = vmatprep.subr.bf16.mxu0 0
    %207 = vmatpush1.bf16.msra.mxu0 0
    %208 = vmatprep.subr.bf16.mxu0 0
    %209 = vmatpush1.bf16.msra.mxu0 0
    %210 = vmatprep.subr.bf16.mxu0 0
    %211 = vmatpush1.bf16.msra.mxu0 0
    %212 = vmatprep.subr.bf16.mxu0 0
    %213 = vmatpush1.bf16.msra.mxu0 0
    %214 = vmatprep.subr.bf16.mxu0 0
    %215 = vmatpush1.bf16.msra.mxu0 0
    %216 = vmatprep.subr.bf16.mxu0 0
    %217 = vmatpush1.bf16.msra.mxu0 0
    %218 = vmatprep.subr.bf16.mxu0 0
    %219 = vmatpush1.bf16.msra.mxu0 0
    %220 = vmatprep.subr.bf16.mxu0 0
    %221 = vmatpush1.bf16.msra.mxu0 0
    %222 = vmatprep.mubr.bf16.mxu0 0
    %223 = vmatmul.mubr.bf16.gmra.mrb[0].mxu0 %v118
    %v224 = vpop.f32.mrb[0].mxu0
    %v225 = vadd.f32 %v140, %v224
    %v226 = vpop.f32.mrb[0].mxu0
    %v227 = vpop.f32.mrb[0].mxu0
    %v228 = vpop.f32.mrb[0].mxu0
    %229 = vdwg.mxu0
    %v230 = vpack.c.bf16 %v225, %v225
    %231 = vst [vmem:[%s5] sm:$0xf] %v230
    // Predicated region
    $region30: #{policy_forward.1} parent=1 // pred_check
      _
    $region31: #{policy_forward.1} parent=1 // pred_check_branch
      %233 = sbr.rel (0) target = $region33
    $region32: #{policy_forward.1} parent=1 // pred_region
      _
    $region33: #{policy_forward.1} parent=1 // pred_fallthru
      _
    // Predicated region
    $region34: #{policy_forward.1} parent=1 // pred_check
      _
    $region35: #{policy_forward.1} parent=1 // pred_check_branch
      %235 = sbr.rel (0) target = $region37
    $region36: #{policy_forward.1} parent=1 // pred_region
      _
    $region37: #{policy_forward.1} parent=1 // pred_fallthru
      _
    %236 = vsyncpa [#allocation3], 1
    %237 = vsyncpa [#allocation5], 1

</llo_original>
